<compile_context>
chip_gen: v6e
topology: v6e:2x2x1
jax: 0.10.0
libtpu: 0.0.40
codegen_flags: <defaults>
</compile_context>

<pallas_src>
import functools

import jax
import jax.numpy as jnp
from jax.experimental import pallas as pl
from jax.experimental.pallas import tpu as pltpu

LANES = 128
SUBLANES = 8
MAX_ROW_TILE = 8192                    # 8192 x 128 x 4B = 4 MiB per f32 block
VMEM_LIMIT_BYTES = 48 * 1024 * 1024    # explicit scoped-VMEM budget (v5e..v7x)


def _modulating(d, gamma):
    """|true - p| ** gamma with cheap special cases (avoids exp(g*log(d)))."""
    if gamma == 0.0:
        return jnp.ones_like(d)
    if gamma == 1.0:
        return d
    if gamma == 1.5:
        # TODO(synk): on v7x (EUP-bound) replace jnp.sqrt with a VPU-only
        # bit-trick rsqrt approx + Newton to drop one EUP op per element.
        return d * jnp.sqrt(d)
    if gamma == 2.0:
        return d * d
    return d ** gamma


def _qfocal_elementwise(x, y, gamma, alpha):
    # Upcast inside the kernel (inputs may arrive as bf16 -> half DMA bytes).
    x = x.astype(jnp.float32)
    y = y.astype(jnp.float32)
    p = jax.nn.sigmoid(x)
    # BCE-with-logits: max(x,0) - x*y + log1p(exp(-|x|)).
    # log1p(exp(-|x|)) == -log(sigmoid(|x|)) == -log(where(x>=0, p, 1-p));
    # reuses the sigmoid -> one fewer exp/element.  For |x| >~ 17 this
    # saturates to 0 (abs err ~1e-7 vs exact log1p form).
    softplus_neg_abs = -jnp.log(jnp.where(x >= 0.0, p, 1.0 - p))
    bce = jnp.maximum(x, 0.0) - x * y + softplus_neg_abs
    alpha_factor = y * alpha + (1.0 - y) * (1.0 - alpha)
    return bce * alpha_factor * _modulating(jnp.abs(y - p), gamma)


def _row_group_sum(x, row_tile):
    # Reduce groups of 8 rows with pure VPU adds (no per-step XLU reduce).
    return jnp.sum(x.reshape(row_tile // SUBLANES, SUBLANES, LANES), axis=0)


def _qfocal_partial_kernel(o_ref, t_ref, res_ref, *, gamma, alpha, row_tile,
                           last_block_valid, needs_mask):
    """Per-block (8,128) partial sums; grid is fully parallel."""
    loss = _qfocal_elementwise(o_ref[...], t_ref[...], gamma, alpha)
    if needs_mask:
        # Only the LAST block can contain invalid elements (lane padding and
        # partial-block OOB garbage); mask it there only.  Block-local index
        # and a static limit -> no int32 overflow for huge tensors, and no
        # per-element mask cost on interior blocks.
        is_last = pl.program_id(0) == pl.num_programs(0) - 1

        @pl.when(is_last)
        def _():
            row = jax.lax.broadcasted_iota(jnp.int32, loss.shape, 0)
            lane = jax.lax.broadcasted_iota(jnp.int32, loss.shape, 1)
            idx = row * LANES + lane
            masked = jnp.where(idx < last_block_valid, loss, 0.0)
            res_ref[...] = _row_group_sum(masked, row_tile)

        @pl.when(jnp.logical_not(is_last))
        def _():
            res_ref[...] = _row_group_sum(loss, row_tile)
    else:
        res_ref[...] = _row_group_sum(loss, row_tile)


def _qfocal_none_kernel(o_ref, t_ref, res_ref, *, gamma, alpha):
    res_ref[...] = _qfocal_elementwise(
        o_ref[...], t_ref[...], gamma, alpha).astype(res_ref.dtype)


def qfocal_loss(output, true, gamma=1.5, alpha=0.25, reduction="mean"):
    """Pallas QFocalLoss forward.

    reduction='mean' -> loss.mean(); 'sum' -> loss.sum(); 'none' -> per-element
    loss with the original shape and dtype.
    """
    assert output.shape == true.shape
    orig_shape = output.shape
    n_elem = int(output.size)

    # Keep native dtype on the HBM->VMEM path (no wrapper-side upcast).
    flat_o = output.reshape(-1)
    flat_t = true.reshape(-1)

    # Pad ONLY to the next multiple of 128 lanes (<=127 elems) when misaligned;
    # never to a full block multiple (that would add an extra HBM pass).
    rows = pl.cdiv(n_elem, LANES)
    lane_pad = rows * LANES - n_elem
    if lane_pad:
        flat_o = jnp.pad(flat_o, (0, lane_pad))
        flat_t = jnp.pad(flat_t, (0, lane_pad))
    o2 = flat_o.reshape(rows, LANES)
    t2 = flat_t.reshape(rows, LANES)

    row_tile = min(MAX_ROW_TILE,
                   ((rows + SUBLANES - 1) // SUBLANES) * SUBLANES)
    block_elems = row_tile * LANES
    num_blocks = pl.cdiv(n_elem, block_elems)
    needs_mask = (num_blocks * block_elems != n_elem)
    last_block_valid = n_elem - (num_blocks - 1) * block_elems  # static, >0

    grid = (num_blocks,)
    in_specs = [pl.BlockSpec((row_tile, LANES), lambda i: (i, 0))] * 2
    # TODO(synk): on v7x confirm both TensorCores pick up grid blocks; if only
    # one TC is busy, switch to pltpu.CORE_PARALLEL / pl.core_map.
    compiler_params = pltpu.CompilerParams(
        dimension_semantics=("parallel",),
        vmem_limit_bytes=VMEM_LIMIT_BYTES)

    if reduction in ("mean", "sum"):
        kernel = functools.partial(
            _qfocal_partial_kernel, gamma=gamma, alpha=alpha,
            row_tile=row_tile, last_block_valid=last_block_valid,
            needs_mask=needs_mask)
        partials = pl.pallas_call(
            kernel,
            out_shape=jax.ShapeDtypeStruct((num_blocks * SUBLANES, LANES),
                                           jnp.float32),
            grid_spec=pltpu.PrefetchScalarGridSpec(
                num_scalar_prefetch=0,
                grid=grid,
                in_specs=in_specs,
                out_specs=pl.BlockSpec((SUBLANES, LANES), lambda i: (i, 0)),
            ),
            compiler_params=compiler_params,
        )(o2, t2)
        total = jnp.sum(partials, dtype=jnp.float32)
        if reduction == "mean":
            return total / jnp.float32(n_elem)
        return total

    # reduction == 'none': elementwise weighted loss, original shape & dtype.
    # Output is exactly (cdiv(n,128), 128); OOB writes of a partial last block
    # are dropped, so for lane-aligned sizes the final slice is a no-op view.
    kernel = functools.partial(_qfocal_none_kernel, gamma=gamma, alpha=alpha)
    res = pl.pallas_call(
        kernel,
        out_shape=jax.ShapeDtypeStruct((rows, LANES), output.dtype),
        grid_spec=pltpu.PrefetchScalarGridSpec(
            num_scalar_prefetch=0,
            grid=grid,
            in_specs=in_specs,
            out_specs=pl.BlockSpec((row_tile, LANES), lambda i: (i, 0)),
        ),
        compiler_params=compiler_params,
    )(o2, t2)
    out = res.reshape(-1)
    if lane_pad:
        out = out[:n_elem]
    return out.reshape(orig_shape)


def _qfocal_ref(output, true, gamma=1.5, alpha=0.25, reduction="mean"):
    x = output.astype(jnp.float32)
    y = true.astype(jnp.float32)
    bce = jnp.maximum(x, 0.0) - x * y + jnp.log1p(jnp.exp(-jnp.abs(x)))
    p = jax.nn.sigmoid(x)
    loss = bce * (y * alpha + (1 - y) * (1 - alpha)) * jnp.abs(y - p) ** gamma
    if reduction == "mean":
        return loss.mean()
    if reduction == "sum":
        return loss.sum()
    return loss


if __name__ == "__main__":
    key = jax.random.PRNGKey(0)
    k1, k2, k3, k4 = jax.random.split(key, 4)

    # Shapes consistent with a YOLO head: (batch, channels, H, W).
    output = jax.random.normal(k1, (2, 4, 16, 16), dtype=jnp.float32)
    true = (jax.random.uniform(k2, (2, 4, 16, 16)) > 0.8).astype(jnp.float32)

    # mean (the YOLOv5 default)
    res_mean = jax.block_until_ready(
        qfocal_loss(output, true, gamma=1.5, alpha=0.25, reduction="mean"))
    ref_mean = _qfocal_ref(output, true, 1.5, 0.25, "mean")
    assert jnp.allclose(res_mean, ref_mean, rtol=1e-5, atol=1e-6), (res_mean,
                                                                    ref_mean)

    # sum
    res_sum = jax.block_until_ready(
        qfocal_loss(output, true, gamma=1.5, alpha=0.25, reduction="sum"))
    ref_sum = _qfocal_ref(output, true, 1.5, 0.25, "sum")
    assert jnp.allclose(res_sum, ref_sum, rtol=1e-5, atol=1e-4), (res_sum,
                                                                  ref_sum)

    # none (elementwise, lane-aligned size)
    res_none = jax.block_until_ready(
        qfocal_loss(output, true, gamma=1.5, alpha=0.25, reduction="none"))
    ref_none = _qfocal_ref(output, true, 1.5, 0.25, "none")
    assert res_none.shape == ref_none.shape
    assert jnp.allclose(res_none, ref_none, rtol=1e-5, atol=1e-6)

    # misaligned size (exercises lane padding + last-block mask + partial block)
    out_m = jax.random.normal(k3, (3, 5, 7), dtype=jnp.float32)
    true_m = (jax.random.uniform(k4, (3, 5, 7)) > 0.8).astype(jnp.float32)
    res_m = jax.block_until_ready(
        qfocal_loss(out_m, true_m, gamma=1.5, alpha=0.25, reduction="mean"))
    ref_m = _qfocal_ref(out_m, true_m, 1.5, 0.25, "mean")
    assert jnp.allclose(res_m, ref_m, rtol=1e-5, atol=1e-6), (res_m, ref_m)

    print("KERNEL_OK")
</pallas_src>

<mosaic_0001>
module attributes {stable_mosaic.version = 11 : i64} {
  func.func @_qfocal_partial_kernel(%arg0: i32, %arg1: memref<16x128xf32, #tpu.memory_space<vmem>>, %arg2: memref<16x128xf32, #tpu.memory_space<vmem>>, %arg3: memref<8x128xf32, #tpu.memory_space<vmem>>) attributes {dimension_semantics = [#tpu.dimension_semantics<parallel>], iteration_bounds = array<i64: 1>, scalar_prefetch = 0 : i64, scratch_operands = 0 : i64, tpu.core_type = #tpu.core_type<tc>, window_params = [{transform_indices = @transform_0, window_bounds = array<i64: 16, 128>}, {transform_indices = @transform_1, window_bounds = array<i64: 16, 128>}, {transform_indices = @transform_2, window_bounds = array<i64: 8, 128>}]} {
    %c0 = arith.constant 0 : index
    %c0_0 = arith.constant 0 : index
    %0 = vector.load %arg1[%c0, %c0_0] : memref<16x128xf32, #tpu.memory_space<vmem>>, vector<16x128xf32>
    %c0_1 = arith.constant 0 : index
    %c0_2 = arith.constant 0 : index
    %1 = vector.load %arg2[%c0_1, %c0_2] : memref<16x128xf32, #tpu.memory_space<vmem>>, vector<16x128xf32>
    %2 = arith.negf %0 : vector<16x128xf32>
    %3 = math.exp %2 : vector<16x128xf32>
    %cst = arith.constant 1.000000e+00 : f32
    %4 = vector.broadcast %cst : f32 to vector<16x128xf32>
    %5 = arith.addf %4, %3 : vector<16x128xf32>
    %6 = arith.divf %4, %5 : vector<16x128xf32>
    %cst_3 = arith.constant 0.000000e+00 : f32
    %7 = vector.broadcast %cst_3 : f32 to vector<16x128xf32>
    %8 = arith.cmpf oge, %0, %7 : vector<16x128xf32>
    %cst_4 = arith.constant 1.000000e+00 : f32
    %9 = vector.broadcast %cst_4 : f32 to vector<16x128xf32>
    %10 = arith.subf %9, %6 : vector<16x128xf32>
    %11 = arith.select %8, %6, %10 : vector<16x128xi1>, vector<16x128xf32>
    %12 = math.log %11 : vector<16x128xf32>
    %cst_5 = arith.constant 0.000000e+00 : f32
    %13 = vector.broadcast %cst_5 : f32 to vector<16x128xf32>
    %14 = arith.subf %13, %12 : vector<16x128xf32>
    %cst_6 = arith.constant 0.000000e+00 : f32
    %15 = vector.broadcast %cst_6 : f32 to vector<16x128xf32>
    %16 = arith.maximumf %0, %15 : vector<16x128xf32>
    %17 = arith.mulf %0, %1 : vector<16x128xf32>
    %18 = arith.subf %16, %17 : vector<16x128xf32>
    %19 = arith.addf %18, %14 : vector<16x128xf32>
    %cst_7 = arith.constant 2.500000e-01 : f32
    %20 = vector.broadcast %cst_7 : f32 to vector<16x128xf32>
    %21 = arith.mulf %1, %20 : vector<16x128xf32>
    %cst_8 = arith.constant 1.000000e+00 : f32
    %22 = vector.broadcast %cst_8 : f32 to vector<16x128xf32>
    %23 = arith.subf %22, %1 : vector<16x128xf32>
    %cst_9 = arith.constant 7.500000e-01 : f32
    %24 = vector.broadcast %cst_9 : f32 to vector<16x128xf32>
    %25 = arith.mulf %23, %24 : vector<16x128xf32>
    %26 = arith.addf %21, %25 : vector<16x128xf32>
    %27 = arith.mulf %19, %26 : vector<16x128xf32>
    %28 = arith.subf %1, %6 : vector<16x128xf32>
    %29 = math.absf %28 : vector<16x128xf32>
    %30 = math.sqrt %29 : vector<16x128xf32>
    %31 = arith.mulf %29, %30 : vector<16x128xf32>
    %32 = arith.mulf %27, %31 : vector<16x128xf32>
    %33 = vector.shape_cast %32 : vector<16x128xf32> to vector<2x8x128xf32>
    %cst_10 = arith.constant dense<0.000000e+00> : vector<8x128xf32>
    %34 = vector.multi_reduction <add>, %33, %cst_10 [0] : vector<2x8x128xf32> to vector<8x128xf32>
    %c0_11 = arith.constant 0 : index
    %c0_12 = arith.constant 0 : index
    %35 = vector.load %arg3[%c0_11, %c0_12] : memref<8x128xf32, #tpu.memory_space<vmem>>, vector<8x128xf32>
    tpu.vector_store %arg3[%c0_11, %c0_12], %34 {strides = array<i32>} : memref<8x128xf32, #tpu.memory_space<vmem>>, vector<8x128xf32>,
    return
  }
  func.func @transform_0(%arg0: i32) -> (i32, i32) {
    %c0_i32 = arith.constant 0 : i32
    %c0_i32_0 = arith.constant 0 : i32
    return %arg0, %c0_i32 : i32, i32
  }
  func.func @transform_1(%arg0: i32) -> (i32, i32) {
    %c0_i32 = arith.constant 0 : i32
    %c0_i32_0 = arith.constant 0 : i32
    return %arg0, %c0_i32 : i32, i32
  }
  func.func @transform_2(%arg0: i32) -> (i32, i32) {
    %c0_i32 = arith.constant 0 : i32
    %c0_i32_0 = arith.constant 0 : i32
    return %arg0, %c0_i32 : i32, i32
  }
}

</mosaic_0001>

<llo_original>
// kernel: tpu_custom_call.1
$region0: #{tpu_custom_call.1}
  #allocation0 [shape = 'u32[]', space=smem, size = 0x4, offset = 0x4, fixed_abs, tag = 'smem constant byte address 0x4 - core index']
  #allocation1 [shape = 'u32[144,128]{1,0:T(1,128)}', space=vmem, size = 0x12000, scoped, tag = 'internal scratch']
  %s0 = inlined_call_operand.hbm [shape: f32[16,128], index: 0, kind: input, shape index: {}]
  %s1 = inlined_call_operand.hbm [shape: f32[16,128], index: 1, kind: input, shape index: {}]
  %s2 = inlined_call_operand.hbm [shape: f32[8,128], index: 2, kind: output, shape index: {}]
  %s3 = sld [smem:[#allocation0]]
  $region26: #{tpu_custom_call.1} parent=0
    _
  %s5 = ssub.s32 1, %s3
  %s6 = scalar_select 0, %s5, %s3
  $region1: #{tpu_custom_call.1} parent=0
    #allocation2 [shape = 'u8[8192]{0}', space=vmem, size = 0x2000, scoped, tag = 'input window, operand 0, single buffered']
    #allocation3 [shape = 's32[1]{0}', space=sflag, size = 0x4, scoped, tag = 'scoped memory for tpu_custom_call.1']
    #allocation4 [shape = 's32[1]{0}', space=sflag, size = 0x4, scoped, tag = 'scoped memory for tpu_custom_call.1']
    #allocation5 [shape = 'u8[8192]{0}', space=vmem, size = 0x2000, scoped, tag = 'input window, operand 1, single buffered']
    #allocation6 [shape = 's32[1]{0}', space=sflag, size = 0x4, scoped, tag = 'scoped memory for tpu_custom_call.1']
    #allocation7 [shape = 'u8[4096]{0}', space=vmem, size = 0x1000, scoped, tag = 'output window, operand 0, single buffered']
    %7 = vsyncpa [#allocation3], 0
    %8 = vsyncpa [#allocation6], 0
    %9 = vsyncpa [#allocation4], 0
    // Predicated region
    $region2: #{tpu_custom_call.1} parent=1 // pred_check
      _
    $region3: #{tpu_custom_call.1} parent=1 // pred_check_branch
      %11 = sbr.rel (0) target = $region5
    $region4: #{tpu_custom_call.1} parent=1 // pred_region
      %s13 = ssub.s32 256, 256
      %14 = vsyncadd [#allocation3], %s13
      %s15 = sshll.u32 [#allocation2], 4
      %s16 = int_to_ptr.vmem [resolvable:$true] %s15
      %21 = dma.hbm_to_vmem [thread:$0]  %s0, 256, %s16, [#allocation3], 128, 128, 8
    $region5: #{tpu_custom_call.1} parent=1 // pred_fallthru
      _
    // Predicated region
    $region6: #{tpu_custom_call.1} parent=1 // pred_check
      _
    $region7: #{tpu_custom_call.1} parent=1 // pred_check_branch
      %23 = sbr.rel (0) target = $region9
    $region8: #{tpu_custom_call.1} parent=1 // pred_region
      %s25 = ssub.s32 256, 256
      %26 = vsyncadd [#allocation6], %s25
      %s27 = sshll.u32 [#allocation5], 4
      %s28 = int_to_ptr.vmem [resolvable:$true] %s27
      %33 = dma.hbm_to_vmem [thread:$0]  %s1, 256, %s28, [#allocation6], 128, 128, 8
    $region9: #{tpu_custom_call.1} parent=1 // pred_fallthru
      _
    // Predicated region
    $region10: #{tpu_custom_call.1} parent=1 // pred_check
      _
    $region11: #{tpu_custom_call.1} parent=1 // pred_check_branch
      %35 = sbr.rel (0) target = $region13
    $region12: #{tpu_custom_call.1} parent=1 // pred_region
      %36 = dma.done [#allocation3], 256
    $region13: #{tpu_custom_call.1} parent=1 // pred_fallthru
      _
    // Predicated region
    $region14: #{tpu_custom_call.1} parent=1 // pred_check
      _
    $region15: #{tpu_custom_call.1} parent=1 // pred_check_branch
      %38 = sbr.rel (0) target = $region17
    $region16: #{tpu_custom_call.1} parent=1 // pred_region
      %39 = dma.done [#allocation6], 256
    $region17: #{tpu_custom_call.1} parent=1 // pred_fallthru
      _
    %v40 = vld [vmem:[#allocation2] sm:$0xff]
    %v41 = vld [vmem:[#allocation2 + $0x8] sm:$0xff]
    %v42 = vld [vmem:[#allocation5] sm:$0xff]
    %v43 = vld [vmem:[#allocation5 + $0x8] sm:$0xff]
    %v44 = vxor.u32 %v40, 2147483648
    %v45 = vxor.u32 %v41, 2147483648
    %v46 = vmul.f32 %v44, 1.442695
    %v47 = vpow.pop %v46
    %v48 = vmul.f32 %v45, 1.442695
    %v49 = vpow.pop %v48
    %v50 = vadd.f32 %v47, 1.0
    %v51 = vadd.f32 %v49, 1.0
    %v52 = vrcp.pop %v50
    %v53 = vmul.f32 1.0, %v52
    %v54 = vrcp.pop %v51
    %v55 = vmul.f32 1.0, %v54
    %vm56 = vcmp.ge.f32.partialorder %v40, 0.0
    %vm57 = vcmp.ge.f32.partialorder %v41, 0.0
    %v58 = vsub.f32 1.0, %v53
    %v59 = vsub.f32 1.0, %v55
    %v60 = vsel %vm56, %v53, %v58
    %v61 = vsel %vm57, %v55, %v59
    %v62 = vlog2.pop %v60
    %v63 = vmul.f32 %v62, 0.6931472
    %v64 = vlog2.pop %v61
    %v65 = vmul.f32 %v64, 0.6931472
    %v66 = vsub.f32 0.0, %v63
    %v67 = vsub.f32 0.0, %v65
    %v68 = vmax.f32 %v40, 0.0
    %v69 = vmax.f32 %v41, 0.0
    %v70 = vmul.f32 %v40, %v42
    %v71 = vmul.f32 %v41, %v43
    %v72 = vsub.f32 %v68, %v70
    %v73 = vsub.f32 %v69, %v71
    %v74 = vadd.f32 %v72, %v66
    %v75 = vadd.f32 %v73, %v67
    %v76 = vmul.f32 %v42, 0.25
    %v77 = vmul.f32 %v43, 0.25
    %v78 = vsub.f32 1.0, %v42
    %v79 = vsub.f32 1.0, %v43
    %v80 = vmul.f32 %v78, 0.75
    %v81 = vmul.f32 %v79, 0.75
    %v82 = vadd.f32 %v76, %v80
    %v83 = vadd.f32 %v77, %v81
    %v84 = vmul.f32 %v74, %v82
    %v85 = vmul.f32 %v75, %v83
    %v86 = vsub.f32 %v42, %v53
    %v87 = vsub.f32 %v43, %v55
    %v88 = vand.u32 2147483647, %v86
    %v89 = vand.u32 2147483647, %v87
    %v90 = vrsqrt.pop %v88
    %v91 = vmul.f32 %v88, %v90
    %vm92 = vcmp.eq.f32.partialorder %v88, inf
    %v93 = vsel %vm92, %v88, %v91
    %vm94 = vcmp.eq.f32.partialorder %v88, 0.0
    %v95 = vand.u32 %v88, 2147483648
    %v96 = vsel %vm94, %v95, %v93
    %v97 = vrsqrt.pop %v89
    %v98 = vmul.f32 %v89, %v97
    %vm99 = vcmp.eq.f32.partialorder %v89, inf
    %v100 = vsel %vm99, %v89, %v98
    %vm101 = vcmp.eq.f32.partialorder %v89, 0.0
    %v102 = vand.u32 %v89, 2147483648
    %v103 = vsel %vm101, %v102, %v100
    %v104 = vmul.f32 %v88, %v96
    %v105 = vmul.f32 %v89, %v103
    %v106 = vmul.f32 %v84, %v104
    %v107 = vmul.f32 %v85, %v105
    %v108 = vadd.f32 %v106, %v107
    %109 = vst [vmem:[#allocation7] sm:$0xff] %v108
    // Predicated region
    $region18: #{tpu_custom_call.1} parent=1 // pred_check
      _
    $region19: #{tpu_custom_call.1} parent=1 // pred_check_branch
      %111 = sbr.rel (0) target = $region21
    $region20: #{tpu_custom_call.1} parent=1 // pred_region
      %s113 = ssub.s32 128, 128
      %114 = vsyncadd [#allocation4], %s113
      %s116 = sshll.u32 [#allocation7], 4
      %s117 = int_to_ptr.vmem [resolvable:$true] %s116
      %119 = dma.vmem_to_hbm [thread:$0]  %s117, 128, %s2, [#allocation4]
    $region21: #{tpu_custom_call.1} parent=1 // pred_fallthru
      _
    // Predicated region
    $region22: #{tpu_custom_call.1} parent=1 // pred_check
      _
    $region23: #{tpu_custom_call.1} parent=1 // pred_check_branch
      %121 = sbr.rel (0) target = $region25
    $region24: #{tpu_custom_call.1} parent=1 // pred_region
      %122 = dma.done [#allocation4], 128
    $region25: #{tpu_custom_call.1} parent=1 // pred_fallthru
      _
    %123 = vsyncpa [#allocation3], 1
    %124 = vsyncpa [#allocation6], 1
    %125 = vsyncpa [#allocation4], 1

</llo_original>
